<compile_context>
chip_gen: v7x
topology: tpu7x:2x2x1
jax: 0.10.0
libtpu: 0.0.40
codegen_flags: <defaults>
</compile_context>

<pallas_src>
import functools

import jax
import jax.numpy as jnp
from jax.experimental import pallas as pl
from jax.experimental.pallas import tpu as pltpu


# Approx bytes/element of in-kernel f32 temporaries per style (upcast tile,
# exp tile, iota tiles, ...), used for VMEM footprint accounting.
_F32_TEMP_BYTES = {'symmetric': 12, 'row': 8, 'softmax': 12, 'row-norm': 12}


def _round_up(x, mult):
    return ((x + mult - 1) // mult) * mult


def _sublane_multiple(in_bytes):
    # f32 -> 8, bf16 -> 16, int8/fp8 -> 32 (packed sublane granularity)
    return 8 * max(1, 4 // max(in_bytes, 1))


def _vmem_capacity_bytes():
    """Physical VMEM per TensorCore (64 MiB on v7x, 128 MiB on v5e/v6e)."""
    try:
        return int(pltpu.get_tpu_info().vmem_capacity_bytes)
    except Exception:
        return 64 * 1024 * 1024     # conservative fallback (v7x)


def _device_supports_bf16_eup():
    """v6e / v7x EUPs have a bf16 path; v5e and older do not."""
    try:
        kind = jax.devices()[0].device_kind.lower()
    except Exception:
        return False
    return any(tag in kind for tag in ("v6", "v7", "7x"))


def _pick_row_tile(n_rows, n_cols, in_bytes, out_bytes, style, budget_bytes,
                   row_tile=None):
    """Largest row tile fitting the VMEM budget, then capped for >=2-4 grid steps."""
    mult = _sublane_multiple(in_bytes)
    if row_tile is not None:
        tm = min(int(row_tile), n_rows)
        if tm < n_rows:
            tm = max(mult, (tm // mult) * mult)
        return tm

    budget = budget_bytes
    if style == 'symmetric':
        # resident (1, n) f32 column scale, sublane-padded and double-buffered
        budget -= 64 * n_cols
    per_row = n_cols * (2 * in_bytes + 2 * out_bytes
                        + _F32_TEMP_BYTES.get(style, 12))
    tm = min(512, max(mult, budget // max(per_row, 1)))
    tm = max(mult, (tm // mult) * mult)
    if tm >= n_rows:
        tm = n_rows

    # Guarantee >=2 (ideally 4) grid steps: pipeline overlap + both v7x cores.
    if n_rows > mult:
        target_steps = 4 if n_rows >= 4 * mult else 2
        cap_rows = _round_up(pl.cdiv(n_rows, target_steps), mult)
        tm = min(tm, cap_rows)
    return tm


# ---------------------------------------------------------------------------
# Kernels
# ---------------------------------------------------------------------------

def _symmetric_kernel(r_row_ref, r_col_ref, adj_ref, out_ref, *, add_loop):
    """out = r_inv[rows,None] * (A_tile [+ I_tile]) * r_inv[None,cols]."""
    a = adj_ref[...].astype(jnp.float32)
    if add_loop:
        tm = a.shape[0]
        row0 = pl.program_id(0) * tm
        rows = jax.lax.broadcasted_iota(jnp.int32, a.shape, 0) + row0
        cols = jax.lax.broadcasted_iota(jnp.int32, a.shape, 1)
        a = a + (rows == cols).astype(jnp.float32)
    # Two-sided diagonal scale done elementwise (no MXU, no (N,N) diag matrix).
    out_ref[...] = (r_row_ref[...] * a * r_col_ref[...]).astype(out_ref.dtype)


def _rowwise_kernel(adj_ref, out_ref, *, style, p, bf16_exp):
    a = adj_ref[...].astype(jnp.float32)
    if style == 'row':
        rowsum = jnp.sum(a, axis=-1, keepdims=True)
        r_inv = pl.reciprocal(rowsum, approx=True)          # EUP slot, ~free
        r_inv = jnp.where(rowsum == 0.0, 0.0, r_inv)         # 1/0 -> 0 (as torch)
        out = r_inv * a
    elif style == 'softmax':
        m = jnp.max(a, axis=-1, keepdims=True)
        z = a - m
        if bf16_exp:
            # v6e/v7x EUP runs bf16 exp ~2x f32; softmax is EUP-bound.
            e = jnp.exp(z.astype(jnp.bfloat16)).astype(jnp.float32)
        else:
            e = jnp.exp(z)
        denom = jnp.sum(e, axis=-1, keepdims=True)
        out = e * pl.reciprocal(denom, approx=True)
    elif style == 'row-norm':
        pp = 2.0 if p is None else float(p)
        if pp == 2.0:
            # max(sqrt(ss), 1e-12) == sqrt(max(ss, 1e-24)); use rsqrt (EUP).
            ss = jnp.sum(a * a, axis=-1, keepdims=True)
            out = a * jax.lax.rsqrt(jnp.maximum(ss, 1e-24))
        elif pp == 1.0:
            s = jnp.sum(jnp.abs(a), axis=-1, keepdims=True)
            out = a * pl.reciprocal(jnp.maximum(s, 1e-12), approx=True)
        else:
            is_small_int = float(pp).is_integer() and 3.0 <= pp <= 4.0
            if is_small_int:
                # keep per-element work on the VPU (no per-element pow)
                absa = jnp.abs(a)
                powed = absa
                for _ in range(int(pp) - 1):
                    powed = powed * absa
                s = jnp.sum(powed, axis=-1, keepdims=True)
            else:
                s = jnp.sum(jnp.abs(a) ** pp, axis=-1, keepdims=True)
            norm = s ** (1.0 / pp)                            # per-row only
            out = a / jnp.maximum(norm, 1e-12)
    else:
        raise ValueError(f"unsupported style: {style}")
    out_ref[...] = out.astype(out_ref.dtype)


# ---------------------------------------------------------------------------
# Wrapper
# ---------------------------------------------------------------------------

def pallas_normalize(adj, style='symmetric', add_loop=True, p=None,
                     row_tile=None, out_dtype=jnp.float32, rowsum=None):
    """Dense matrix normalization, equivalent to opengsl Normalize(style, add_loop, p).

    `adj` may be any dtype (bf16 / int8 adjacency recommended for HBM bandwidth).
    `out_dtype` defaults to float32 for parity with torch; pass bfloat16 to halve
    HBM write traffic.  `rowsum` (symmetric only) optionally provides precomputed
    row sums of `adj` (without the self-loop) to skip an extra pass over A.
    `row_tile` optionally overrides the auto tile size.
    """
    n, m = adj.shape
    in_bytes = jnp.dtype(adj.dtype).itemsize
    out_bytes = jnp.dtype(out_dtype).itemsize

    # --- pad columns to a 128 multiple so every store is lane-dense ---------
    m_pad = _round_up(m, 128)
    pad_cols = m_pad - m
    if pad_cols:
        pad_val = -jnp.inf if style == 'softmax' else 0
        adj_p = jnp.pad(adj, ((0, 0), (0, pad_cols)), constant_values=pad_val)
    else:
        adj_p = adj

    # --- generation-aware VMEM budget / tile size ---------------------------
    vmem_cap = _vmem_capacity_bytes()
    vmem_limit = int(vmem_cap * 0.7)            # scoped-VMEM ceiling for Mosaic
    budget = int(vmem_limit * 0.8)              # headroom for compiler temps
    tm = _pick_row_tile(n, m_pad, in_bytes, out_bytes, style, budget, row_tile)
    grid = (pl.cdiv(n, tm),)

    compiler_params = pltpu.CompilerParams(
        dimension_semantics=("parallel",),      # shard row tiles across TCs (v7x)
        vmem_limit_bytes=vmem_limit,
    )

    out_shape = jax.ShapeDtypeStruct((n, m_pad), out_dtype)
    adj_spec = pl.BlockSpec((tm, m_pad), lambda i: (i, 0))
    out_spec = pl.BlockSpec((tm, m_pad), lambda i: (i, 0))
    io_bytes = n * m_pad * (in_bytes + out_bytes)

    if style == 'symmetric':
        assert n == m, "'symmetric' normalization requires a square matrix"
        # Cheap O(N^2) row-sum precompute (pure JAX reduce) unless the caller
        # already has degrees -- then we skip a full HBM read of A.
        if rowsum is None:
            rowsum = jnp.sum(adj, axis=1, dtype=jnp.float32)
        else:
            rowsum = jnp.asarray(rowsum, dtype=jnp.float32)
        if add_loop:
            rowsum = rowsum + 1.0
        r_inv = rowsum ** -0.5
        r_inv = jnp.where(jnp.isinf(r_inv), 0.0, r_inv)
        r_row = r_inv.reshape(n, 1)                              # (tm,1) tiles
        r_col = r_inv.reshape(1, n)                              # full (1,n)
        if pad_cols:
            r_col = jnp.pad(r_col, ((0, 0), (0, pad_cols)))
        kernel = functools.partial(_symmetric_kernel, add_loop=add_loop)
        cost = pl.CostEstimate(flops=3 * n * m_pad, transcendentals=0,
                               bytes_accessed=io_bytes + 8 * n)
        out = pl.pallas_call(
            kernel,
            out_shape=out_shape,
            grid=grid,
            in_specs=[
                pl.BlockSpec((tm, 1), lambda i: (i, 0)),
                pl.BlockSpec((1, m_pad), lambda i: (0, 0)),
                adj_spec,
            ],
            out_specs=out_spec,
            compiler_params=compiler_params,
            cost_estimate=cost,
        )(r_row, r_col, adj_p)
        return out[:, :m] if pad_cols else out

    bf16_exp = style == 'softmax' and _device_supports_bf16_eup()
    kernel = functools.partial(_rowwise_kernel, style=style, p=p,
                               bf16_exp=bf16_exp)
    if style == 'softmax':
        transcendentals = n * m_pad
    elif style == 'row-norm':
        pp = 2.0 if p is None else float(p)
        generic = not (pp in (1.0, 2.0) or (float(pp).is_integer() and pp <= 4.0))
        transcendentals = 2 * n * m_pad if generic else n     # exp+log per elem
    else:
        transcendentals = n
    cost = pl.CostEstimate(flops=4 * n * m_pad, transcendentals=transcendentals,
                           bytes_accessed=io_bytes)
    out = pl.pallas_call(
        kernel,
        out_shape=out_shape,
        grid=grid,
        in_specs=[adj_spec],
        out_specs=out_spec,
        compiler_params=compiler_params,
        cost_estimate=cost,
    )(adj_p)
    return out[:, :m] if pad_cols else out


# ---------------------------------------------------------------------------
# Pure-JAX reference mirroring the PyTorch code
# ---------------------------------------------------------------------------

def _ref_normalize(adj, style='symmetric', add_loop=True, p=None):
    adj = adj.astype(jnp.float32)
    n = adj.shape[0]
    if style == 'symmetric':
        a = adj + jnp.eye(n, dtype=jnp.float32) if add_loop else adj
        rowsum = a.sum(1)
        r_inv = rowsum ** (-0.5)
        r_inv = jnp.where(jnp.isinf(r_inv), 0.0, r_inv)
        d = jnp.diag(r_inv)
        return d @ a @ d
    if style == 'row':
        rowsum = adj.sum(1)
        r_inv = 1.0 / rowsum
        r_inv = jnp.where(jnp.isinf(r_inv), 0.0, r_inv)
        return jnp.diag(r_inv) @ adj
    if style == 'softmax':
        return jax.nn.softmax(adj, axis=-1)
    if style == 'row-norm':
        pp = 2.0 if p is None else float(p)
        norm = jnp.sum(jnp.abs(adj) ** pp, axis=-1, keepdims=True) ** (1.0 / pp)
        return adj / jnp.maximum(norm, 1e-12)
    raise ValueError(style)


if __name__ == "__main__":
    key = jax.random.PRNGKey(0)
    N = 256
    # deterministic synthetic dense adjacency: sparse-ish 0/1 matrix
    probs = jax.random.uniform(key, (N, N), dtype=jnp.float32)
    adj_f32 = (probs < 0.1).astype(jnp.float32)
    adj_bf16 = adj_f32.astype(jnp.bfloat16)   # narrow HBM dtype (lossless for 0/1)

    cases = [('symmetric', None), ('row', None), ('softmax', None),
             ('row-norm', 2.0), ('row-norm', 1.0), ('row-norm', 3.0),
             ('row-norm', 2.5)]

    ok = True
    for style, p in cases:
        for row_tile in (None, 64):           # auto tile and explicit tile size
            out = pallas_normalize(adj_bf16, style=style, add_loop=True, p=p,
                                   row_tile=row_tile)
            out = jax.block_until_ready(out)
            ref = _ref_normalize(adj_f32, style=style, add_loop=True, p=p)
            if not jnp.allclose(out, ref, atol=1e-3, rtol=1e-3):
                ok = False
                err = float(jnp.max(jnp.abs(out - ref)))
                print(f"MISMATCH style={style} p={p} tile={row_tile} max_err={err}")

    # unaligned column count: wrapper pads to a 128 multiple and slices back
    Nu = 200
    adj_u_f32 = (jax.random.uniform(jax.random.PRNGKey(1), (Nu, Nu)) < 0.1
                 ).astype(jnp.float32)
    adj_u_bf16 = adj_u_f32.astype(jnp.bfloat16)
    for style, p in [('symmetric', None), ('softmax', None), ('row', None)]:
        out = jax.block_until_ready(
            pallas_normalize(adj_u_bf16, style=style, add_loop=True, p=p))
        ref = _ref_normalize(adj_u_f32, style=style, add_loop=True, p=p)
        if not jnp.allclose(out, ref, atol=1e-3, rtol=1e-3):
            ok = False
            err = float(jnp.max(jnp.abs(out - ref)))
            print(f"MISMATCH unaligned style={style} max_err={err}")

    # bf16 output (halves HBM write traffic); looser tolerance for the narrow cast
    ref_sym = _ref_normalize(adj_f32, style='symmetric')
    out_bf16 = jax.block_until_ready(
        pallas_normalize(adj_bf16, style='symmetric', out_dtype=jnp.bfloat16))
    if not jnp.allclose(out_bf16.astype(jnp.float32), ref_sym, atol=2e-2, rtol=2e-2):
        ok = False
        print("MISMATCH bf16 output")

    # precomputed degrees skip the extra row-sum pass over A
    deg = jnp.sum(adj_f32, axis=1)
    out_pre = jax.block_until_ready(
        pallas_normalize(adj_bf16, style='symmetric', rowsum=deg))
    if not jnp.allclose(out_pre, ref_sym, atol=1e-3, rtol=1e-3):
        ok = False
        print("MISMATCH precomputed rowsum")

    if ok:
        print("KERNEL_OK")
</pallas_src>

<mosaic_0001>
module attributes {stable_mosaic.version = 11 : i64} {
  func.func @_symmetric_kernel(%arg0: i32, %arg1: memref<64x1xf32, #tpu.memory_space<vmem>>, %arg2: memref<1x256xf32, #tpu.memory_space<vmem>>, %arg3: memref<64x256xbf16, #tpu.memory_space<vmem>>, %arg4: memref<64x256xf32, #tpu.memory_space<vmem>>) attributes {dimension_semantics = [#tpu.dimension_semantics<parallel>], iteration_bounds = array<i64: 4>, scalar_prefetch = 0 : i64, scratch_operands = 0 : i64, tpu.core_type = #tpu.core_type<tc>, window_params = [{transform_indices = @transform_0, window_bounds = array<i64: 64, 1>}, {pipeline_mode = #tpu.pipeline_mode<synchronous>, transform_indices = @transform_1, window_bounds = array<i64: 1, 256>}, {transform_indices = @transform_2, window_bounds = array<i64: 64, 256>}, {transform_indices = @transform_3, window_bounds = array<i64: 64, 256>}]} {
    %c0 = arith.constant 0 : index
    %c0_0 = arith.constant 0 : index
    %0 = vector.load %arg3[%c0, %c0_0] : memref<64x256xbf16, #tpu.memory_space<vmem>>, vector<64x256xbf16>
    %1 = arith.extf %0 : vector<64x256xbf16> to vector<64x256xf32>
    %c64_i32 = arith.constant 64 : i32
    %2 = arith.muli %arg0, %c64_i32 : i32
    %3 = tpu.iota {dimensions = array<i32: 0>} : vector<64x256xi32>
    %4 = vector.broadcast %2 : i32 to vector<64x256xi32>
    %5 = arith.addi %3, %4 : vector<64x256xi32>
    %6 = tpu.iota {dimensions = array<i32: 1>} : vector<64x256xi32>
    %7 = arith.cmpi eq, %5, %6 : vector<64x256xi32>
    %8 = arith.extui %7 : vector<64x256xi1> to vector<64x256xi32>
    %9 = arith.sitofp %8 : vector<64x256xi32> to vector<64x256xf32>
    %10 = arith.addf %1, %9 : vector<64x256xf32>
    %c0_1 = arith.constant 0 : index
    %c0_2 = arith.constant 0 : index
    %11 = vector.load %arg1[%c0_1, %c0_2] : memref<64x1xf32, #tpu.memory_space<vmem>>, vector<64x1xf32>
    %12 = vector.broadcast %11 : vector<64x1xf32> to vector<64x256xf32>
    %13 = arith.mulf %12, %10 : vector<64x256xf32>
    %c0_3 = arith.constant 0 : index
    %c0_4 = arith.constant 0 : index
    %14 = vector.load %arg2[%c0_3, %c0_4] : memref<1x256xf32, #tpu.memory_space<vmem>>, vector<1x256xf32>
    %15 = vector.broadcast %14 : vector<1x256xf32> to vector<64x256xf32>
    %16 = arith.mulf %13, %15 : vector<64x256xf32>
    %c0_5 = arith.constant 0 : index
    %c0_6 = arith.constant 0 : index
    %17 = vector.load %arg4[%c0_5, %c0_6] : memref<64x256xf32, #tpu.memory_space<vmem>>, vector<64x256xf32>
    tpu.vector_store %arg4[%c0_5, %c0_6], %16 {strides = array<i32>} : memref<64x256xf32, #tpu.memory_space<vmem>>, vector<64x256xf32>,
    return
  }
  func.func @transform_0(%arg0: i32) -> (i32, i32) {
    %c0_i32 = arith.constant 0 : i32
    %c0_i32_0 = arith.constant 0 : i32
    return %arg0, %c0_i32 : i32, i32
  }
  func.func @transform_1(%arg0: i32) -> (i32, i32) {
    %c0_i32 = arith.constant 0 : i32
    %c0_i32_0 = arith.constant 0 : i32
    %c0_i32_1 = arith.constant 0 : i32
    return %c0_i32, %c0_i32_0 : i32, i32
  }
  func.func @transform_2(%arg0: i32) -> (i32, i32) {
    %c0_i32 = arith.constant 0 : i32
    %c0_i32_0 = arith.constant 0 : i32
    return %arg0, %c0_i32 : i32, i32
  }
  func.func @transform_3(%arg0: i32) -> (i32, i32) {
    %c0_i32 = arith.constant 0 : i32
    %c0_i32_0 = arith.constant 0 : i32
    return %arg0, %c0_i32 : i32, i32
  }
}

</mosaic_0001>

<llo_original>
// kernel: tpu_custom_call.1
$region0: #{tpu_custom_call.1}
  #allocation0 [shape = 'u32[]', space=smem, size = 0x4, offset = 0x4, fixed_abs, tag = 'smem constant byte address 0x4 - core index']
  #allocation1 [shape = 'u32[144,128]{1,0:T(1,128)}', space=vmem, size = 0x12000, scoped, tag = 'internal scratch']
  %s0 = inlined_call_operand.vmem [shape: f32[256,1], index: 0, kind: input, shape index: {}]
  %s1 = inlined_call_operand.vmem [shape: f32[1,256], index: 1, kind: input, shape index: {}]
  %s2 = inlined_call_operand.vmem [shape: bf16[256,256], index: 2, kind: input, shape index: {}]
  %s3 = inlined_call_operand.hbm [shape: f32[256,256], index: 3, kind: output, shape index: {}]
  %s4 = sld [smem:[#allocation0]]
  $region45: #{tpu_custom_call.1} parent=0
    _
  %s6 = ssub.s32 1, %s4
  %s7 = scalar_select 0, %s6, %s4
  $region1: #{tpu_custom_call.1} parent=0
    #allocation2 [shape = 'u8[131072]{0}', space=vmem, size = 0x20000, scoped, tag = 'output window, operand 0']
    #allocation3 [shape = 's32[2]{0}', space=sflag, size = 0x8, scoped, tag = 'scoped memory for tpu_custom_call.1']
    %8 = vsyncpa [#allocation3], 0
    %s9 = scalar_lea.sflag [#allocation3], 1
    %10 = vsyncpa %s9, 0
    loop: start=0, step=1, limit=6
    $region2: #{tpu_custom_call.1} parent=1 // loop_pre_header
      _
    $region3: #{tpu_custom_call.1} parent=1 // loop_header
      %s12 = sphi 0, %s16
      %p13 = scmp.ge.s32.totalorder %s12, 6
      %s22 = sphi 0, %s24
      %s25 = sphi 0, %s22
      %s26 = sphi 0, %s25
      %s42 = sphi 0, %s26
      %s46 = sphi 0, %s46
      %s48 = sphi 0, %s46
      %s49 = sphi 0, %s48
      %s63 = sphi 0, %s49
      %s69 = sphi 0, %s71
      %s72 = sphi 0, %s69
      %s73 = sphi 0, %s72
      %s89 = sphi 0, %s73
      %s95 = sphi 0, %s97
      %s98 = sphi 0, %s95
      %s99 = sphi 0, %s98
      %s115 = sphi 0, %s99
    $region4: #{tpu_custom_call.1} parent=1 // loop_header_branch
      %15 = sbr.rel (%p13) target = $region8
    $region5: #{tpu_custom_call.1} parent=1 // loop_body
      %s17 = ssub.s32 %s12, 1
      %s18 = ssub.s32 %s12, 2
      %s19 = sadd.s32 %s12, 1
      %s20 = ssub.s32 %s12, %s19
      %p21 = scmp.eq.s32.totalorder %s20, 0
      %s23 = sadd.s32 %s22, 1
      %s24 = scalar_select %p21, %s22, %s23
      %p27 = pneg %p21
      %p28 = scmp.eq.s32.totalorder %s12, 3
      %p29 = por %p27, %p28
      %p30 = scmp.ne.s32.totalorder %s22, %s25
      %p31 = scmp.eq.s32.totalorder %s12, 0
      %p32 = por %p30, %p31
      %p33 = scmp.ne.s32.totalorder %s22, %s25
      %p34 = scmp.eq.s32.totalorder %s17, 3
      %p35 = por %p33, %p34
      %p36 = scmp.ne.s32.totalorder %s25, %s26
      %p37 = scmp.eq.s32.totalorder %s17, 0
      %p38 = por %p36, %p37
      %p39 = scmp.ne.s32.totalorder %s25, %s26
      %p40 = scmp.eq.s32.totalorder %s18, 3
      %p41 = por %p39, %p40
      %p43 = scmp.ne.s32.totalorder %s26, %s42
      %p44 = scmp.eq.s32.totalorder %s18, 0
      %p45 = por %p43, %p44
      %s47 = sadd.s32 %s46, 1
      %p50 = scmp.eq.s32.totalorder %s12, 3
      %p51 = scmp.ne.s32.totalorder %s46, %s48
      %p52 = scmp.eq.s32.totalorder %s12, 0
      %p53 = por %p51, %p52
      %p54 = scmp.ne.s32.totalorder %s46, %s48
      %p55 = scmp.eq.s32.totalorder %s17, 3
      %p56 = por %p54, %p55
      %p57 = scmp.ne.s32.totalorder %s48, %s49
      %p58 = scmp.eq.s32.totalorder %s17, 0
      %p59 = por %p57, %p58
      %p60 = scmp.ne.s32.totalorder %s48, %s49
      %p61 = scmp.eq.s32.totalorder %s18, 3
      %p62 = por %p60, %p61
      %p64 = scmp.ne.s32.totalorder %s49, %s63
      %p65 = scmp.eq.s32.totalorder %s18, 0
      %p66 = por %p64, %p65
      %s67 = ssub.s32 %s12, %s19
      %p68 = scmp.eq.s32.totalorder %s67, 0
      %s70 = sadd.s32 %s69, 1
      %s71 = scalar_select %p68, %s69, %s70
      %p74 = pneg %p68
      %p75 = scmp.eq.s32.totalorder %s12, 3
      %p76 = por %p74, %p75
      %p77 = scmp.ne.s32.totalorder %s69, %s72
      %p78 = scmp.eq.s32.totalorder %s12, 0
      %p79 = por %p77, %p78
      %p80 = scmp.ne.s32.totalorder %s69, %s72
      %p81 = scmp.eq.s32.totalorder %s17, 3
      %p82 = por %p80, %p81
      %p83 = scmp.ne.s32.totalorder %s72, %s73
      %p84 = scmp.eq.s32.totalorder %s17, 0
      %p85 = por %p83, %p84
      %p86 = scmp.ne.s32.totalorder %s72, %s73
      %p87 = scmp.eq.s32.totalorder %s18, 3
      %p88 = por %p86, %p87
      %p90 = scmp.ne.s32.totalorder %s73, %s89
      %p91 = scmp.eq.s32.totalorder %s18, 0
      %p92 = por %p90, %p91
      %s93 = ssub.s32 %s12, %s19
      %p94 = scmp.eq.s32.totalorder %s93, 0
      %s96 = sadd.s32 %s95, 1
      %s97 = scalar_select %p94, %s95, %s96
      %p100 = pneg %p94
      %p101 = scmp.eq.s32.totalorder %s12, 3
      %p102 = por %p100, %p101
      %p103 = scmp.ne.s32.totalorder %s95, %s98
      %p104 = scmp.eq.s32.totalorder %s12, 0
      %p105 = por %p103, %p104
      %p106 = scmp.ne.s32.totalorder %s95, %s98
      %p107 = scmp.eq.s32.totalorder %s17, 3
      %p108 = por %p106, %p107
      %p109 = scmp.ne.s32.totalorder %s98, %s99
      %p110 = scmp.eq.s32.totalorder %s17, 0
      %p111 = por %p109, %p110
      %p112 = scmp.ne.s32.totalorder %s98, %s99
      %p113 = scmp.eq.s32.totalorder %s18, 3
      %p114 = por %p112, %p113
      %p116 = scmp.ne.s32.totalorder %s99, %s115
      %p117 = scmp.eq.s32.totalorder %s18, 0
      %p118 = por %p116, %p117
      %p119 = scmp.le.s32.totalorder 1, %s12
      %p120 = scmp.lt.s32.totalorder %s12, 5
      %p121 = pnand %p119, %p120
      %p122 = pneg %p121
      // Predicated region
      $region9: #{tpu_custom_call.1} parent=5 // pred_check
        _
      $region10: #{tpu_custom_call.1} parent=5 // pred_check_branch
        %124 = sbr.rel (%p121) target = $region12
      $region11: #{tpu_custom_call.1} parent=5 // pred_region
        %s125 = ssub.s32 %s12, 1
        // Predicated region
        $region13: #{tpu_custom_call.1} parent=11 // pred_check
          %p126 = pneg %p59
        $region14: #{tpu_custom_call.1} parent=11 // pred_check_branch
          %128 = sbr.rel (%p126) target = $region16
        $region15: #{tpu_custom_call.1} parent=11 // pred_region
          _
        $region16: #{tpu_custom_call.1} parent=11 // pred_fallthru
          _
      $region12: #{tpu_custom_call.1} parent=5 // pred_fallthru
        _
      %p129 = scmp.lt.s32.totalorder %s12, 4
      // Predicated region
      $region17: #{tpu_custom_call.1} parent=5 // pred_check
        %p130 = pneg %p129
      $region18: #{tpu_custom_call.1} parent=5 // pred_check_branch
        %132 = sbr.rel (%p130) target = $region20
      $region19: #{tpu_custom_call.1} parent=5 // pred_region
        // Predicated region
        $region21: #{tpu_custom_call.1} parent=19 // pred_check
          %p133 = pneg %p32
        $region22: #{tpu_custom_call.1} parent=19 // pred_check_branch
          %135 = sbr.rel (%p133) target = $region24
        $region23: #{tpu_custom_call.1} parent=19 // pred_region
          %s136 = smul.u32 8, %s12
          %p137 = scmp.lt.s32.totalorder %s136, 31
          %s138 = scalar_select %p137, %s136, 31
          %s139 = smul.addr %s138, 8
          %s140 = scalar_lea.vmem %s0, %s139
          %s141 = smul.u32 8, %s12
        $region24: #{tpu_custom_call.1} parent=19 // pred_fallthru
          _
        // Predicated region
        $region25: #{tpu_custom_call.1} parent=19 // pred_check
          %p142 = pneg %p79
        $region26: #{tpu_custom_call.1} parent=19 // pred_check_branch
          %144 = sbr.rel (%p142) target = $region28
        $region27: #{tpu_custom_call.1} parent=19 // pred_region
          %s145 = smul.u32 8, %s12
          %p146 = scmp.lt.s32.totalorder %s145, 31
          %s147 = scalar_select %p146, %s145, 31
          %s148 = smul.addr %s147, 2
          %s149 = smul.addr %s148, 4
          %s150 = scalar_lea.vmem %s2, %s149
          %s151 = smul.u32 8, %s12
        $region28: #{tpu_custom_call.1} parent=19 // pred_fallthru
          _
      $region20: #{tpu_custom_call.1} parent=5 // pred_fallthru
        _
      %p152 = scmp.le.s32.totalorder 1, %s12
      %p153 = scmp.lt.s32.totalorder %s12, 5
      %p154 = pnand %p152, %p153
      %p155 = pneg %p154
      // Predicated region
      $region29: #{tpu_custom_call.1} parent=5 // pred_check
        _
      $region30: #{tpu_custom_call.1} parent=5 // pred_check_branch
        %157 = sbr.rel (%p154) target = $region32
      $region31: #{tpu_custom_call.1} parent=5 // pred_region
        %s158 = ssub.s32 %s12, 1
        %s159 = smul.u32 8, %s17
        %p160 = scmp.lt.s32.totalorder %s159, 31
        %s161 = scalar_select %p160, %s159, 31
        %s162 = smul.addr %s161, 8
        %s163 = scalar_lea.vmem %s0, %s162
        %p164 = pneg %p38
        %p165 = pneg %p35
        %p166 = pneg %p59
        %p167 = pneg %p56
        %s168 = smul.u32 8, %s17
        %p169 = scmp.lt.s32.totalorder %s168, 31
        %s170 = scalar_select %p169, %s168, 31
        %s171 = smul.addr %s170, 2
        %s172 = smul.addr %s171, 4
        %s173 = scalar_lea.vmem %s2, %s172
        %p174 = pneg %p85
        %p175 = pneg %p82
        %p176 = pneg %p111
        %p177 = pneg %p108
        %s178 = sand.u32 %s98, 1
        %s179 = scalar_lea.sflag [#allocation3], %s178
        %s180 = sand.u32 %s98, 1
        %s181 = smul.addr %s180, 128
        %s182 = scalar_lea.vmem [#allocation2], %s181
        %s183 = smul.u32 8, %s17
        %p184 = scmp.lt.s32.totalorder %s183, 31
        %s185 = scalar_select %p184, %s183, 31
        %s186 = smul.addr %s185, 8
        %s187 = scalar_lea.vmem %s0, %s186
        %s188 = smul.u32 8, %s17
        %s189 = smul.u32 8, %s17
        %p190 = scmp.lt.s32.totalorder %s189, 31
        %s191 = scalar_select %p190, %s189, 31
        %s192 = smul.addr %s191, 2
        %s193 = smul.addr %s192, 4
        %s194 = scalar_lea.vmem %s2, %s193
        %s195 = smul.u32 8, %s17
        %s196 = smul.u32 8, %s17
        %v197 = vld [vmem:[%s194] sm:$0xff]
        %v198 = vld [vmem:[%s194 + $0x8] sm:$0xff]
        %v199 = vld [vmem:[%s194 + $0x10] sm:$0xff]
        %v200 = vld [vmem:[%s194 + $0x18] sm:$0xff]
        %v201 = vld [vmem:[%s194 + $0x20] sm:$0xff]
        %v202 = vld [vmem:[%s194 + $0x28] sm:$0xff]
        %v203 = vld [vmem:[%s194 + $0x30] sm:$0xff]
        %v204 = vld [vmem:[%s194 + $0x38] sm:$0xff]
        %v205 = vunpack.c.l.bf16 %v197
        %v206 = vunpack.c.h.bf16 %v197
        %v207 = vunpack.c.l.bf16 %v198
        %v208 = vunpack.c.h.bf16 %v198
        %v209 = vunpack.c.l.bf16 %v199
        %v210 = vunpack.c.h.bf16 %v199
        %v211 = vunpack.c.l.bf16 %v200
        %v212 = vunpack.c.h.bf16 %v200
        %v213 = vunpack.c.l.bf16 %v201
        %v214 = vunpack.c.h.bf16 %v201
        %v215 = vunpack.c.l.bf16 %v202
        %v216 = vunpack.c.h.bf16 %v202
        %v217 = vunpack.c.l.bf16 %v203
        %v218 = vunpack.c.h.bf16 %v203
        %v219 = vunpack.c.l.bf16 %v204
        %v220 = vunpack.c.h.bf16 %v204
        %s221 = smul.u32 %s17, 64
        %v222 = vlaneseq
        %v223 = vshrl.u32 %v222, 7
        %v224 = vadd.s32 %v223, 8
        %v225 = vadd.s32 %v223, 16
        %v226 = vadd.s32 %v223, 24
        %v227 = vadd.s32 %v223, 32
        %v228 = vadd.s32 %v223, 40
        %v229 = vadd.s32 %v223, 48
        %v230 = vadd.s32 %v223, 56
        %v231 = vstv %s221
        %v232 = vadd.s32 %v223, %v231
        %v233 = vadd.s32 %v224, %v231
        %v234 = vadd.s32 %v225, %v231
        %v235 = vadd.s32 %v226, %v231
        %v236 = vadd.s32 %v227, %v231
        %v237 = vadd.s32 %v228, %v231
        %v238 = vadd.s32 %v229, %v231
        %v239 = vadd.s32 %v230, %v231
        %v240 = vlaneseq
        %v241 = vand.u32 %v240, 127
        %v242 = vadd.s32 %v241, 128
        %vm243 = vcmp.eq.s32.totalorder %v232, %v241
        %vm244 = vcmp.eq.s32.totalorder %v232, %v242
        %vm245 = vcmp.eq.s32.totalorder %v233, %v241
        %vm246 = vcmp.eq.s32.totalorder %v233, %v242
        %vm247 = vcmp.eq.s32.totalorder %v234, %v241
        %vm248 = vcmp.eq.s32.totalorder %v234, %v242
        %vm249 = vcmp.eq.s32.totalorder %v235, %v241
        %vm250 = vcmp.eq.s32.totalorder %v235, %v242
        %vm251 = vcmp.eq.s32.totalorder %v236, %v241
        %vm252 = vcmp.eq.s32.totalorder %v236, %v242
        %vm253 = vcmp.eq.s32.totalorder %v237, %v241
        %vm254 = vcmp.eq.s32.totalorder %v237, %v242
        %vm255 = vcmp.eq.s32.totalorder %v238, %v241
        %vm256 = vcmp.eq.s32.totalorder %v238, %v242
        %vm257 = vcmp.eq.s32.totalorder %v239, %v241
        %vm258 = vcmp.eq.s32.totalorder %v239, %v242
        %v259 = vsel %vm243, 1, 0
        %v260 = vsel %vm244, 1, 0
        %v261 = vsel %vm245, 1, 0
        %v262 = vsel %vm246, 1, 0
        %v263 = vsel %vm247, 1, 0
        %v264 = vsel %vm248, 1, 0
        %v265 = vsel %vm249, 1, 0
        %v266 = vsel %vm250, 1, 0
        %v267 = vsel %vm251, 1, 0
        %v268 = vsel %vm252, 1, 0
        %v269 = vsel %vm253, 1, 0
        %v270 = vsel %vm254, 1, 0
        %v271 = vsel %vm255, 1, 0
        %v272 = vsel %vm256, 1, 0
        %v273 = vsel %vm257, 1, 0
        %v274 = vsel %vm258, 1, 0
        %v275 = vcvt.s32.f32 %v259
        %v276 = vcvt.s32.f32 %v260
        %v277 = vcvt.s32.f32 %v261
        %v278 = vcvt.s32.f32 %v262
        %v279 = vcvt.s32.f32 %v263
        %v280 = vcvt.s32.f32 %v264
        %v281 = vcvt.s32.f32 %v265
        %v282 = vcvt.s32.f32 %v266
        %v283 = vcvt.s32.f32 %v267
        %v284 = vcvt.s32.f32 %v268
        %v285 = vcvt.s32.f32 %v269
        %v286 = vcvt.s32.f32 %v270
        %v287 = vcvt.s32.f32 %v271
        %v288 = vcvt.s32.f32 %v272
        %v289 = vcvt.s32.f32 %v273
        %v290 = vcvt.s32.f32 %v274
        %v291 = vadd.f32 %v205, %v275
        %v292 = vadd.f32 %v206, %v276
        %v293 = vadd.f32 %v207, %v277
        %v294 = vadd.f32 %v208, %v278
        %v295 = vadd.f32 %v209, %v279
        %v296 = vadd.f32 %v210, %v280
        %v297 = vadd.f32 %v211, %v281
        %v298 = vadd.f32 %v212, %v282
        %v299 = vadd.f32 %v213, %v283
        %v300 = vadd.f32 %v214, %v284
        %v301 = vadd.f32 %v215, %v285
        %v302 = vadd.f32 %v216, %v286
        %v303 = vadd.f32 %v217, %v287
        %v304 = vadd.f32 %v218, %v288
        %v305 = vadd.f32 %v219, %v289
        %v306 = vadd.f32 %v220, %v290
        %v307 = vld [vmem:[%s187] sm:$0xff]
        %v308 = vld [vmem:[%s187 + $0x8] sm:$0xff]
        %v309 = vld [vmem:[%s187 + $0x10] sm:$0xff]
        %v310 = vld [vmem:[%s187 + $0x18] sm:$0xff]
        %v311 = vld [vmem:[%s187 + $0x20] sm:$0xff]
        %v312 = vld [vmem:[%s187 + $0x28] sm:$0xff]
        %v313 = vld [vmem:[%s187 + $0x30] sm:$0xff]
        %v314 = vld [vmem:[%s187 + $0x38] sm:$0xff]
        %316 = vset.pattern.permute.xlu0 0
        %317 = vperm.xlu0 %316, %v307
        %v318 = vpop.permute.xlu0 %317
        %321 = vset.pattern.permute.xlu0 0
        %322 = vperm.xlu0 %321, %v308
        %v323 = vpop.permute.xlu0 %322
        %326 = vset.pattern.permute.xlu0 0
        %327 = vperm.xlu0 %326, %v309
        %v328 = vpop.permute.xlu0 %327
        %331 = vset.pattern.permute.xlu0 0
        %332 = vperm.xlu0 %331, %v310
        %v333 = vpop.permute.xlu0 %332
        %336 = vset.pattern.permute.xlu0 0
        %337 = vperm.xlu0 %336, %v311
        %v338 = vpop.permute.xlu0 %337
        %341 = vset.pattern.permute.xlu0 0
        %342 = vperm.xlu0 %341, %v312
        %v343 = vpop.permute.xlu0 %342
        %346 = vset.pattern.permute.xlu0 0
        %347 = vperm.xlu0 %346, %v313
        %v348 = vpop.permute.xlu0 %347
        %351 = vset.pattern.permute.xlu0 0
        %352 = vperm.xlu0 %351, %v314
        %v353 = vpop.permute.xlu0 %352
        %v355 = vmul.f32 %v318, %v291
        %v356 = vmul.f32 %v318, %v292
        %v357 = vmul.f32 %v323, %v293
        %v358 = vmul.f32 %v323, %v294
        %v359 = vmul.f32 %v328, %v295
        %v360 = vmul.f32 %v328, %v296
        %v361 = vmul.f32 %v333, %v297
        %v362 = vmul.f32 %v333, %v298
        %v363 = vmul.f32 %v338, %v299
        %v364 = vmul.f32 %v338, %v300
        %v365 = vmul.f32 %v343, %v301
        %v366 = vmul.f32 %v343, %v302
        %v367 = vmul.f32 %v348, %v303
        %v368 = vmul.f32 %v348, %v304
        %v369 = vmul.f32 %v353, %v305
        %v370 = vmul.f32 %v353, %v306
        %v371 = vld [vmem:[%s1] sm:$0x3]
        %v373 = vlaneseq
        %v374 = vshrl.u32 %v373, 7
        %v375 = vsub.s32 0, %v374
        %v376 = vrot.slane %v371, %v375
        %v377 = vlaneseq
        %v378 = vshrl.u32 %v377, 7
        %v379 = vsub.s32 1, %v378
        %v380 = vrot.slane %v371, %v379
        %v383 = vmul.f32 %v355, %v376
        %v384 = vmul.f32 %v356, %v380
        %v385 = vmul.f32 %v357, %v376
        %v386 = vmul.f32 %v358, %v380
        %v387 = vmul.f32 %v359, %v376
        %v388 = vmul.f32 %v360, %v380
        %v389 = vmul.f32 %v361, %v376
        %v390 = vmul.f32 %v362, %v380
        %v391 = vmul.f32 %v363, %v376
        %v392 = vmul.f32 %v364, %v380
        %v393 = vmul.f32 %v365, %v376
        %v394 = vmul.f32 %v366, %v380
        %v395 = vmul.f32 %v367, %v376
        %v396 = vmul.f32 %v368, %v380
        %v397 = vmul.f32 %v369, %v376
        %v398 = vmul.f32 %v370, %v380
        %399 = vst [vmem:[%s182] sm:$0xff] %v383
        %400 = vst [vmem:[%s182 + $0x8] sm:$0xff] %v384
        %401 = vst [vmem:[%s182 + $0x10] sm:$0xff] %v385
        %402 = vst [vmem:[%s182 + $0x18] sm:$0xff] %v386
        %403 = vst [vmem:[%s182 + $0x20] sm:$0xff] %v387
        %404 = vst [vmem:[%s182 + $0x28] sm:$0xff] %v388
        %405 = vst [vmem:[%s182 + $0x30] sm:$0xff] %v389
        %406 = vst [vmem:[%s182 + $0x38] sm:$0xff] %v390
        %407 = vst [vmem:[%s182 + $0x40] sm:$0xff] %v391
        %408 = vst [vmem:[%s182 + $0x48] sm:$0xff] %v392
        %409 = vst [vmem:[%s182 + $0x50] sm:$0xff] %v393
        %410 = vst [vmem:[%s182 + $0x58] sm:$0xff] %v394
        %411 = vst [vmem:[%s182 + $0x60] sm:$0xff] %v395
        %412 = vst [vmem:[%s182 + $0x68] sm:$0xff] %v396
        %413 = vst [vmem:[%s182 + $0x70] sm:$0xff] %v397
        %414 = vst [vmem:[%s182 + $0x78] sm:$0xff] %v398
        %s415 = sand.u32 %s98, 1
        %s416 = scalar_lea.sflag [#allocation3], %s415
        %s417 = sand.u32 %s98, 1
        %s418 = smul.addr %s417, 128
        %s419 = scalar_lea.vmem [#allocation2], %s418
        // Predicated region
        $region33: #{tpu_custom_call.1} parent=31 // pred_check
          %p420 = pneg %p108
        $region34: #{tpu_custom_call.1} parent=31 // pred_check_branch
          %422 = sbr.rel (%p420) target = $region36
        $region35: #{tpu_custom_call.1} parent=31 // pred_region
          %s423 = smul.u32 8, %s17
          %s425 = ssub.s32 2048, 2048
          %426 = vsyncadd %s416, %s425
          %s427 = smul.addr %s423, 2
          %s428 = smul.addr %s427, 128
          %s429 = scalar_lea.hbm %s3, %s428
          %s430 = sshll.u32 %s419, 4
          %s431 = int_to_ptr.vmem [resolvable:$true] %s430
          %436 = dma.vmem_to_hbm [thread:$0]  %s431, 2048, %s429, %s416, 256, 256, 16
        $region36: #{tpu_custom_call.1} parent=31 // pred_fallthru
          _
      $region32: #{tpu_custom_call.1} parent=5 // pred_fallthru
        _
      %p437 = scmp.le.s32.totalorder 2, %s12
      // Predicated region
      $region37: #{tpu_custom_call.1} parent=5 // pred_check
        %p438 = pneg %p437
      $region38: #{tpu_custom_call.1} parent=5 // pred_check_branch
        %440 = sbr.rel (%p438) target = $region40
      $region39: #{tpu_custom_call.1} parent=5 // pred_region
        %s441 = ssub.s32 %s12, 2
        // Predicated region
        $region41: #{tpu_custom_call.1} parent=39 // pred_check
          %p442 = pneg %p114
        $region42: #{tpu_custom_call.1} parent=39 // pred_check_branch
          %444 = sbr.rel (%p442) target = $region44
        $region43: #{tpu_custom_call.1} parent=39 // pred_region
          %s445 = sand.u32 %s99, 1
          %s446 = scalar_lea.sflag [#allocation3], %s445
          %s447 = sand.u32 %s99, 1
          %s448 = smul.addr %s447, 128
          %s449 = scalar_lea.vmem [#allocation2], %s448
          %450 = dma.done %s446, 2048
        $region44: #{tpu_custom_call.1} parent=39 // pred_fallthru
          _
      $region40: #{tpu_custom_call.1} parent=5 // pred_fallthru
        _
    $region6: #{tpu_custom_call.1} parent=1 // loop_footer
      %s16 = sadd.s32 1, %s12
    $region7: #{tpu_custom_call.1} parent=1 // loop_footer_branch
      %11 = sbr.rel target = $region3
    $region8: #{tpu_custom_call.1} parent=1 // loop_exit
      _
    %451 = vsyncpa [#allocation3], 1
    %s452 = scalar_lea.sflag [#allocation3], 1
    %453 = vsyncpa %s452, 1

</llo_original>
